<compile_context>
chip_gen: v7x
topology: tpu7x:2x2x1
jax: 0.10.0
libtpu: 0.0.40
codegen_flags: <defaults>
</compile_context>

<pallas_src>
import functools
import math

import jax
import jax.numpy as jnp
from jax import lax
from jax.experimental import pallas as pl
from jax.experimental.pallas import tpu as pltpu


_MXU_DTYPE = jnp.bfloat16   # MXU operand dtype; accumulation stays f32


# ---------------------------------------------------------------------------
# Tiling / VMEM helpers
# ---------------------------------------------------------------------------

def _default_q_tile_pref():
    """Preferred q-tile per TPU generation: 128 on v5e/v7x, 256 on v6e."""
    try:
        kind = jax.devices()[0].device_kind.lower()
    except Exception:
        return 256
    if "v5" in kind or "v7" in kind or "7x" in kind:
        return 128
    return 256


def _q_tiling(s, pref):
    """Return (tq, s_pad).

    Whole q axis in one tile for small/medium S; otherwise tile at pref (or
    128), padding the q axis up to a multiple of the tile so the MXU M
    dimension never drops below 128 (no 64/32/16/8 fall-through)."""
    if s <= pref:
        return s, s
    for t in (pref, 128):
        if s % t == 0:
            return t, s
    t = 128
    return t, ((s + t - 1) // t) * t


def _vmem_limit_bytes(est_bytes):
    """Scoped-VMEM limit: 2x the rough per-step estimate, clamped to the chip."""
    try:
        cap = pltpu.get_tpu_info().vmem_capacity_bytes
    except Exception:
        cap = 64 * 1024 * 1024
    return int(min(max(2 * est_bytes, 32 * 1024 * 1024), int(0.9 * cap)))


# ---------------------------------------------------------------------------
# Kernels
# ---------------------------------------------------------------------------

def _write_q(q_ref, q):
    """Store the (S, D) Q tile, zero-padding the q axis up to the block size
    (padded rows must be finite so the attention kernel stays NaN-free)."""
    s_pad = q_ref.shape[1]
    s, d = q.shape
    if s_pad == s:
        q_ref[0] = q
    else:
        q_ref[0, :s, :] = q
        q_ref[0, s:, :] = jnp.zeros((s_pad - s, d), q_ref.dtype)


def _qkv_proj_fused_kernel(x_ref, w_ref, b_ref, q_ref, k_ref, v_ref):
    """Fused QKV projection: one (S, D) x (D, 3D) bf16 MXU matmul per batch.
    The 1/sqrt(D) softmax scale is pre-folded into the Q columns of w/b."""
    d = k_ref.shape[-1]
    x = x_ref[0]                                              # (S, D) bf16
    qkv = jnp.dot(x, w_ref[...], preferred_element_type=jnp.float32)
    qkv = qkv + b_ref[...]                                    # (S, 3D) f32
    _write_q(q_ref, qkv[:, :d].astype(q_ref.dtype))
    k_ref[0] = qkv[:, d:2 * d].astype(k_ref.dtype)
    v_ref[0] = qkv[:, 2 * d:].astype(v_ref.dtype)


def _qkv_proj_general_kernel(xq_ref, xk_ref, xv_ref, w_ref, b_ref,
                             q_ref, k_ref, v_ref):
    """General path (query/key/value distinct): 3 bf16 matmuls, shared weights."""
    d = k_ref.shape[-1]
    w = w_ref[...]                                            # (D, 3D) bf16
    b = b_ref[...]                                            # (1, 3D) f32

    def proj(x_ref, lo):
        y = jnp.dot(x_ref[0], w[:, lo:lo + d],
                    preferred_element_type=jnp.float32)
        return y + b[:, lo:lo + d]

    _write_q(q_ref, proj(xq_ref, 0).astype(q_ref.dtype))
    k_ref[0] = proj(xk_ref, d).astype(k_ref.dtype)
    v_ref[0] = proj(xv_ref, 2 * d).astype(v_ref.dtype)


def _attention_kernel(s_valid, s_pad, inv_s, q_ref, k_ref, v_ref, wo_ref,
                      bo_ref, out_ref, smean_ref):
    """One (tq, S) attention slab + output projection + smean accumulation."""
    i = pl.program_id(1)
    tq = q_ref.shape[1]

    q = q_ref[0]      # (tq, D) bf16 — 1/sqrt(D) already folded into projection
    k = k_ref[0]      # (S,  D) bf16
    v = v_ref[0]      # (S,  D) bf16

    # Q K^T without materializing a transpose: contract last dims of both.
    s = lax.dot_general(q, k, (((1,), (1,)), ((), ())),
                        preferred_element_type=jnp.float32)    # (tq, S) f32
    m = jnp.max(s, axis=-1, keepdims=True)                     # stable softmax
    e = jnp.exp(s - m)                                         # unnormalized
    l = jnp.sum(e, axis=-1, keepdims=True)                     # (tq, 1)
    inv_l = pl.reciprocal(l, approx=True)                      # EUP slot

    # Flash-style deferred normalization: normalize the (tq, D) PV result
    # instead of the (tq, S) probability slab.
    e_b = e.astype(v.dtype)                                    # bf16, reused 2x
    x = jnp.dot(e_b, v, preferred_element_type=jnp.float32) * inv_l
    y = jnp.dot(x.astype(wo_ref.dtype), wo_ref[...],
                preferred_element_type=jnp.float32) + bo_ref[...]
    out_ref[0] = y.astype(out_ref.dtype)

    # mean(scores, dim=-2): column sums of p = e * inv_l, prescaled by 1/S,
    # pushed onto the MXU as a (1, tq) x (tq, S) matmul and accumulated into
    # the per-batch (1, 1, S) output block across q tiles.
    w_row = inv_l * inv_s                                      # (tq, 1) f32
    if s_pad != s_valid:
        # Mask padded q rows (only present in the last tile of the q axis).
        row = i * tq + lax.broadcasted_iota(jnp.int32, (tq, 1), 0)
        w_row = jnp.where(row < s_valid, w_row, 0.0)
    part = lax.dot_general(w_row.astype(e_b.dtype), e_b,
                           (((0,), (0,)), ((), ())),
                           preferred_element_type=jnp.float32)  # (1, S)

    @pl.when(i == 0)
    def _():
        smean_ref[...] = jnp.zeros_like(smean_ref)

    smean_ref[0] += part


# ---------------------------------------------------------------------------
# Wrapper
# ---------------------------------------------------------------------------

def self_attention(query, key, value, params, fused_qkv=None, q_tile_pref=None):
    """query/key/value: (B, S, D). params: weights stored (in, out), biases (D,).

    Returns (out, mean(scores, axis=-2)); dropout is identity (inference)."""
    B, S, D = query.shape
    out_dtype = query.dtype
    cdt = _MXU_DTYPE

    if q_tile_pref is None:
        q_tile_pref = _default_q_tile_pref()
    tq, s_pad = _q_tiling(S, q_tile_pref)
    nq = s_pad // tq
    scale = 1.0 / math.sqrt(float(D))

    # Pack parameters.  The 1/sqrt(D) softmax scale is folded into the Q
    # projection weights/bias so the score slab never needs an extra VPU pass.
    wqkv = jnp.concatenate(
        [params["wq"] * scale, params["wk"], params["wv"]], axis=1).astype(cdt)
    bqkv = jnp.concatenate(
        [params["bq"] * scale, params["bk"], params["bv"]]).reshape(
            1, 3 * D).astype(jnp.float32)
    wo = params["wo"].astype(cdt)
    bo = params["bo"].reshape(1, D).astype(jnp.float32)

    if fused_qkv is None:
        fused_qkv = (query is key) and (key is value)   # SAM path: q = k = v

    # ---- QKV projection: one (S, D) x (D, 3D) matmul per batch element.
    # grid=(B,) with full-sequence blocks amortizes the per-grid-step overhead.
    x_spec = lambda: pl.BlockSpec((1, S, D), lambda b: (b, 0, 0))
    w3_spec = pl.BlockSpec((D, 3 * D), lambda b: (0, 0))
    b3_spec = pl.BlockSpec((1, 3 * D), lambda b: (0, 0))

    qkv_out_shapes = (
        jax.ShapeDtypeStruct((B, s_pad, D), cdt),   # Q (q axis zero-padded)
        jax.ShapeDtypeStruct((B, S, D), cdt),       # K
        jax.ShapeDtypeStruct((B, S, D), cdt),       # V
    )
    qkv_out_specs = [
        pl.BlockSpec((1, s_pad, D), lambda b: (b, 0, 0)),
        pl.BlockSpec((1, S, D), lambda b: (b, 0, 0)),
        pl.BlockSpec((1, S, D), lambda b: (b, 0, 0)),
    ]

    if fused_qkv:
        proj_kernel = _qkv_proj_fused_kernel
        proj_inputs = (query.astype(cdt), wqkv, bqkv)
        proj_in_specs = [x_spec(), w3_spec, b3_spec]
        n_x = 1
    else:
        proj_kernel = _qkv_proj_general_kernel
        proj_inputs = (query.astype(cdt), key.astype(cdt), value.astype(cdt),
                       wqkv, bqkv)
        proj_in_specs = [x_spec(), x_spec(), x_spec(), w3_spec, b3_spec]
        n_x = 3

    proj_cost = pl.CostEstimate(
        flops=int(2 * B * S * D * 3 * D),
        transcendentals=0,
        bytes_accessed=int(n_x * B * S * D * 2 + D * 3 * D * 2 + 3 * D * 4
                           + (B * s_pad * D + 2 * B * S * D) * 2),
    )

    Q, K, V = pl.pallas_call(
        proj_kernel,
        out_shape=qkv_out_shapes,
        grid_spec=pltpu.PrefetchScalarGridSpec(
            num_scalar_prefetch=0,
            grid=(B,),
            in_specs=proj_in_specs,
            out_specs=qkv_out_specs,
        ),
        compiler_params=pltpu.CompilerParams(
            dimension_semantics=("parallel",)),
        cost_estimate=proj_cost,
    )(*proj_inputs)
    # TODO(synk): the projection could be fused into the attention call (K/V
    # computed into VMEM scratch under pl.when(i == 0)) to remove the Q/K/V
    # HBM round-trip entirely when the per-batch footprint fits VMEM.

    # ---- attention + output projection, tiled over the query axis ----------
    # Grid order (B, nq) with nq innermost is intentional: the constant-index
    # K/V (1, S, D) blocks and the weight/bias blocks are fetched once per
    # batch element; swapping axes would multiply K/V HBM reads by nq.
    attn_kernel = functools.partial(_attention_kernel, S, s_pad, 1.0 / float(S))

    q_spec = pl.BlockSpec((1, tq, D), lambda b, i: (b, i, 0))
    kv_spec = lambda: pl.BlockSpec((1, S, D), lambda b, i: (b, 0, 0))
    # TODO(synk): on v7x (64 MiB VMEM) the K/V and weight blocks could also be
    # single-buffered (pipeline_mode=pl.Buffered(1)); tq=128 on v5e/v7x plus
    # the explicit vmem limit below keeps the footprint in budget instead.
    wo_spec = pl.BlockSpec((D, D), lambda b, i: (0, 0))
    bo_spec = pl.BlockSpec((1, D), lambda b, i: (0, 0))

    attn_cost = pl.CostEstimate(
        flops=int(B * (4 * s_pad * S * D + 2 * s_pad * D * D + 2 * s_pad * S)),
        transcendentals=int(B * s_pad * S),
        bytes_accessed=int(B * s_pad * D * 2 + 2 * B * S * D * 2
                           + D * D * 2 + D * 4
                           + B * s_pad * D * query.dtype.itemsize + B * S * 4),
    )
    vmem_est = int(2 * tq * D * 2            # Q tile (double-buffered)
                   + 2 * 2 * S * D * 2       # K, V blocks (double-buffered)
                   + D * D * 2 + D * 4       # wo, bo
                   + 2 * tq * D * query.dtype.itemsize   # out tile
                   + 2 * S * 4               # smean block
                   + 4 * tq * S * 4)         # f32 score-slab working set

    out, smean = pl.pallas_call(
        attn_kernel,
        out_shape=(
            jax.ShapeDtypeStruct((B, s_pad, D), out_dtype),
            jax.ShapeDtypeStruct((B, 1, S), jnp.float32),
        ),
        grid_spec=pltpu.PrefetchScalarGridSpec(
            num_scalar_prefetch=0,
            grid=(B, nq),
            in_specs=[q_spec, kv_spec(), kv_spec(), wo_spec, bo_spec],
            out_specs=[
                pl.BlockSpec((1, tq, D), lambda b, i: (b, i, 0)),
                pl.BlockSpec((1, 1, S), lambda b, i: (b, 0, 0)),
            ],
        ),
        compiler_params=pltpu.CompilerParams(
            # smean is accumulated across q tiles -> i axis is "arbitrary";
            # b stays "parallel" for megacore sharding.
            dimension_semantics=("parallel", "arbitrary"),
            vmem_limit_bytes=_vmem_limit_bytes(vmem_est),
        ),
        cost_estimate=attn_cost,
    )(Q, K, V, wo, bo)

    if s_pad != S:
        out = out[:, :S, :]
    smean = smean.reshape(B, S)

    # Dropout is identity at inference time.
    return out, smean


# ---------------------------------------------------------------------------
# Parameter init + pure-JAX reference
# ---------------------------------------------------------------------------

def init_params(key, d_dim):
    """Deterministic nn.Linear-style init: U(-1/sqrt(d), 1/sqrt(d)).
    Weights stored pre-transposed as (in, out)."""
    bound = 1.0 / math.sqrt(d_dim)
    keys = jax.random.split(key, 8)

    def u(k, shape):
        return jax.random.uniform(k, shape, jnp.float32, -bound, bound)

    return {
        "wq": u(keys[0], (d_dim, d_dim)), "bq": u(keys[1], (d_dim,)),
        "wk": u(keys[2], (d_dim, d_dim)), "bk": u(keys[3], (d_dim,)),
        "wv": u(keys[4], (d_dim, d_dim)), "bv": u(keys[5], (d_dim,)),
        "wo": u(keys[6], (d_dim, d_dim)), "bo": u(keys[7], (d_dim,)),
    }


def _reference(query, key, value, params, d_dim):
    """Pure-f32 JAX reference for sanity checking."""
    Q = query @ params["wq"] + params["bq"]
    K = key @ params["wk"] + params["bk"]
    V = value @ params["wv"] + params["bv"]
    s = jnp.einsum("bqd,bkd->bqk", Q, K) / math.sqrt(d_dim)
    p = jax.nn.softmax(s, axis=-1)
    x = jnp.einsum("bqk,bkd->bqd", p, V)
    y = x @ params["wo"] + params["bo"]
    return y, jnp.mean(p, axis=-2)


if __name__ == "__main__":
    B, S, D = 2, 8, 32   # small shapes; D plays the role of d_dim=256
    root = jax.random.PRNGKey(0)
    kq, kk, kv, kp, kx3 = jax.random.split(root, 5)

    query = jax.random.normal(kq, (B, S, D), jnp.float32)
    key_ = jax.random.normal(kk, (B, S, D), jnp.float32)
    value = jax.random.normal(kv, (B, S, D), jnp.float32)
    params = init_params(kp, D)

    # 1) General path (distinct q/k/v) — matches SelfAttention.forward exactly.
    out, smean = self_attention(query, key_, value, params)
    out = jax.block_until_ready(out)
    smean = jax.block_until_ready(smean)
    ref_out, ref_smean = _reference(query, key_, value, params, D)
    assert out.shape == (B, S, D) and smean.shape == (B, S)
    # bf16 MXU operands + approx reciprocal => looser agreement vs f32 ref.
    assert jnp.allclose(out, ref_out, atol=5e-2, rtol=5e-2)
    assert jnp.allclose(smean, ref_smean, atol=2e-2, rtol=2e-2)

    # 2) Fused self-attention path (query is key is value — the SAM Model path).
    out2, smean2 = self_attention(query, query, query, params)
    out2 = jax.block_until_ready(out2)
    smean2 = jax.block_until_ready(smean2)
    ref_out2, ref_smean2 = _reference(query, query, query, params, D)
    assert out2.shape == (B, S, D) and smean2.shape == (B, S)
    assert jnp.allclose(out2, ref_out2, atol=5e-2, rtol=5e-2)
    assert jnp.allclose(smean2, ref_smean2, atol=2e-2, rtol=2e-2)

    # 3) q-tiled + padded path (S not a multiple of the 128-row q tile),
    #    exercising the smean accumulator and padded-row masking.
    S3 = 200
    x3 = jax.random.normal(kx3, (B, S3, D), jnp.float32)
    out3, smean3 = self_attention(x3, x3, x3, params, q_tile_pref=128)
    out3 = jax.block_until_ready(out3)
    smean3 = jax.block_until_ready(smean3)
    ref_out3, ref_smean3 = _reference(x3, x3, x3, params, D)
    assert out3.shape == (B, S3, D) and smean3.shape == (B, S3)
    assert jnp.allclose(out3, ref_out3, atol=5e-2, rtol=5e-2)
    assert jnp.allclose(smean3, ref_smean3, atol=2e-2, rtol=2e-2)

    print("KERNEL_OK")
</pallas_src>

<mosaic_0001>
module attributes {stable_mosaic.version = 11 : i64} {
  func.func @_qkv_proj_general_kernel(%arg0: i32, %arg1: memref<1x8x32xbf16, #tpu.memory_space<vmem>>, %arg2: memref<1x8x32xbf16, #tpu.memory_space<vmem>>, %arg3: memref<1x8x32xbf16, #tpu.memory_space<vmem>>, %arg4: memref<32x96xbf16, #tpu.memory_space<vmem>>, %arg5: memref<1x96xf32, #tpu.memory_space<vmem>>, %arg6: memref<1x8x32xbf16, #tpu.memory_space<vmem>>, %arg7: memref<1x8x32xbf16, #tpu.memory_space<vmem>>, %arg8: memref<1x8x32xbf16, #tpu.memory_space<vmem>>) attributes {dimension_semantics = [#tpu.dimension_semantics<parallel>], iteration_bounds = array<i64: 2>, scalar_prefetch = 0 : i64, scratch_operands = 0 : i64, tpu.core_type = #tpu.core_type<tc>, window_params = [{transform_indices = @transform_0, window_bounds = array<i64: 1, 8, 32>}, {transform_indices = @transform_1, window_bounds = array<i64: 1, 8, 32>}, {transform_indices = @transform_2, window_bounds = array<i64: 1, 8, 32>}, {pipeline_mode = #tpu.pipeline_mode<synchronous>, transform_indices = @transform_3, window_bounds = array<i64: 32, 96>}, {pipeline_mode = #tpu.pipeline_mode<synchronous>, transform_indices = @transform_4, window_bounds = array<i64: 1, 96>}, {transform_indices = @transform_5, window_bounds = array<i64: 1, 8, 32>}, {transform_indices = @transform_6, window_bounds = array<i64: 1, 8, 32>}, {transform_indices = @transform_7, window_bounds = array<i64: 1, 8, 32>}]} {
    %c0 = arith.constant 0 : index
    %c0_0 = arith.constant 0 : index
    %0 = vector.load %arg4[%c0, %c0_0] : memref<32x96xbf16, #tpu.memory_space<vmem>>, vector<32x96xbf16>
    %c0_1 = arith.constant 0 : index
    %c0_2 = arith.constant 0 : index
    %1 = vector.load %arg5[%c0_1, %c0_2] : memref<1x96xf32, #tpu.memory_space<vmem>>, vector<1x96xf32>
    %c0_3 = arith.constant 0 : index
    %c0_4 = arith.constant 0 : index
    %c0_5 = arith.constant 0 : index
    %2 = vector.load %arg1[%c0_3, %c0_4, %c0_5] : memref<1x8x32xbf16, #tpu.memory_space<vmem>>, vector<1x8x32xbf16>
    %3 = vector.shape_cast %2 : vector<1x8x32xbf16> to vector<8x32xbf16>
    %4 = vector.extract_strided_slice %0 {offsets = [0, 0], sizes = [32, 32], strides = [1, 1]} : vector<32x96xbf16> to vector<32x32xbf16>
    %cst = arith.constant dense<0.000000e+00> : vector<8x32xf32>
    %5 = tpu.matmul %3, %4, %cst {dimension_numbers = #tpu.dot_dimension_numbers<[1], [0], [0], [1], [0, 0, 1, 1], [], []>} : vector<8x32xbf16>, vector<32x32xbf16>, vector<8x32xf32> -> vector<8x32xf32>
    %6 = vector.extract_strided_slice %1 {offsets = [0, 0], sizes = [1, 32], strides = [1, 1]} : vector<1x96xf32> to vector<1x32xf32>
    %7 = vector.broadcast %6 : vector<1x32xf32> to vector<8x32xf32>
    %8 = arith.addf %5, %7 : vector<8x32xf32>
    %9 = arith.truncf %8 : vector<8x32xf32> to vector<8x32xbf16>
    %c0_6 = arith.constant 0 : index
    %c0_7 = arith.constant 0 : index
    %c0_8 = arith.constant 0 : index
    %10 = vector.load %arg6[%c0_6, %c0_7, %c0_8] : memref<1x8x32xbf16, #tpu.memory_space<vmem>>, vector<1x8x32xbf16>
    %11 = vector.shape_cast %10 : vector<1x8x32xbf16> to vector<8x32xbf16>
    %12 = vector.shape_cast %9 : vector<8x32xbf16> to vector<1x8x32xbf16>
    tpu.vector_store %arg6[%c0_6, %c0_7, %c0_8], %12 {strides = array<i32>} : memref<1x8x32xbf16, #tpu.memory_space<vmem>>, vector<1x8x32xbf16>,
    %c0_9 = arith.constant 0 : index
    %c0_10 = arith.constant 0 : index
    %c0_11 = arith.constant 0 : index
    %13 = vector.load %arg2[%c0_9, %c0_10, %c0_11] : memref<1x8x32xbf16, #tpu.memory_space<vmem>>, vector<1x8x32xbf16>
    %14 = vector.shape_cast %13 : vector<1x8x32xbf16> to vector<8x32xbf16>
    %15 = vector.extract_strided_slice %0 {offsets = [0, 32], sizes = [32, 32], strides = [1, 1]} : vector<32x96xbf16> to vector<32x32xbf16>
    %cst_12 = arith.constant dense<0.000000e+00> : vector<8x32xf32>
    %16 = tpu.matmul %14, %15, %cst_12 {dimension_numbers = #tpu.dot_dimension_numbers<[1], [0], [0], [1], [0, 0, 1, 1], [], []>} : vector<8x32xbf16>, vector<32x32xbf16>, vector<8x32xf32> -> vector<8x32xf32>
    %17 = vector.extract_strided_slice %1 {offsets = [0, 32], sizes = [1, 32], strides = [1, 1]} : vector<1x96xf32> to vector<1x32xf32>
    %18 = vector.broadcast %17 : vector<1x32xf32> to vector<8x32xf32>
    %19 = arith.addf %16, %18 : vector<8x32xf32>
    %20 = arith.truncf %19 : vector<8x32xf32> to vector<8x32xbf16>
    %c0_13 = arith.constant 0 : index
    %c0_14 = arith.constant 0 : index
    %c0_15 = arith.constant 0 : index
    %21 = vector.load %arg7[%c0_13, %c0_14, %c0_15] : memref<1x8x32xbf16, #tpu.memory_space<vmem>>, vector<1x8x32xbf16>
    %22 = vector.shape_cast %21 : vector<1x8x32xbf16> to vector<8x32xbf16>
    %23 = vector.shape_cast %20 : vector<8x32xbf16> to vector<1x8x32xbf16>
    tpu.vector_store %arg7[%c0_13, %c0_14, %c0_15], %23 {strides = array<i32>} : memref<1x8x32xbf16, #tpu.memory_space<vmem>>, vector<1x8x32xbf16>,
    %c0_16 = arith.constant 0 : index
    %c0_17 = arith.constant 0 : index
    %c0_18 = arith.constant 0 : index
    %24 = vector.load %arg3[%c0_16, %c0_17, %c0_18] : memref<1x8x32xbf16, #tpu.memory_space<vmem>>, vector<1x8x32xbf16>
    %25 = vector.shape_cast %24 : vector<1x8x32xbf16> to vector<8x32xbf16>
    %26 = vector.extract_strided_slice %0 {offsets = [0, 64], sizes = [32, 32], strides = [1, 1]} : vector<32x96xbf16> to vector<32x32xbf16>
    %cst_19 = arith.constant dense<0.000000e+00> : vector<8x32xf32>
    %27 = tpu.matmul %25, %26, %cst_19 {dimension_numbers = #tpu.dot_dimension_numbers<[1], [0], [0], [1], [0, 0, 1, 1], [], []>} : vector<8x32xbf16>, vector<32x32xbf16>, vector<8x32xf32> -> vector<8x32xf32>
    %28 = vector.extract_strided_slice %1 {offsets = [0, 64], sizes = [1, 32], strides = [1, 1]} : vector<1x96xf32> to vector<1x32xf32>
    %29 = vector.broadcast %28 : vector<1x32xf32> to vector<8x32xf32>
    %30 = arith.addf %27, %29 : vector<8x32xf32>
    %31 = arith.truncf %30 : vector<8x32xf32> to vector<8x32xbf16>
    %c0_20 = arith.constant 0 : index
    %c0_21 = arith.constant 0 : index
    %c0_22 = arith.constant 0 : index
    %32 = vector.load %arg8[%c0_20, %c0_21, %c0_22] : memref<1x8x32xbf16, #tpu.memory_space<vmem>>, vector<1x8x32xbf16>
    %33 = vector.shape_cast %32 : vector<1x8x32xbf16> to vector<8x32xbf16>
    %34 = vector.shape_cast %31 : vector<8x32xbf16> to vector<1x8x32xbf16>
    tpu.vector_store %arg8[%c0_20, %c0_21, %c0_22], %34 {strides = array<i32>} : memref<1x8x32xbf16, #tpu.memory_space<vmem>>, vector<1x8x32xbf16>,
    return
  }
  func.func @transform_0(%arg0: i32) -> (i32, i32, i32) {
    %c0_i32 = arith.constant 0 : i32
    %c0_i32_0 = arith.constant 0 : i32
    %c0_i32_1 = arith.constant 0 : i32
    return %arg0, %c0_i32, %c0_i32_0 : i32, i32, i32
  }
  func.func @transform_1(%arg0: i32) -> (i32, i32, i32) {
    %c0_i32 = arith.constant 0 : i32
    %c0_i32_0 = arith.constant 0 : i32
    %c0_i32_1 = arith.constant 0 : i32
    return %arg0, %c0_i32, %c0_i32_0 : i32, i32, i32
  }
  func.func @transform_2(%arg0: i32) -> (i32, i32, i32) {
    %c0_i32 = arith.constant 0 : i32
    %c0_i32_0 = arith.constant 0 : i32
    %c0_i32_1 = arith.constant 0 : i32
    return %arg0, %c0_i32, %c0_i32_0 : i32, i32, i32
  }
  func.func @transform_3(%arg0: i32) -> (i32, i32) {
    %c0_i32 = arith.constant 0 : i32
    %c0_i32_0 = arith.constant 0 : i32
    %c0_i32_1 = arith.constant 0 : i32
    return %c0_i32, %c0_i32_0 : i32, i32
  }
  func.func @transform_4(%arg0: i32) -> (i32, i32) {
    %c0_i32 = arith.constant 0 : i32
    %c0_i32_0 = arith.constant 0 : i32
    %c0_i32_1 = arith.constant 0 : i32
    return %c0_i32, %c0_i32_0 : i32, i32
  }
  func.func @transform_5(%arg0: i32) -> (i32, i32, i32) {
    %c0_i32 = arith.constant 0 : i32
    %c0_i32_0 = arith.constant 0 : i32
    %c0_i32_1 = arith.constant 0 : i32
    return %arg0, %c0_i32, %c0_i32_0 : i32, i32, i32
  }
  func.func @transform_6(%arg0: i32) -> (i32, i32, i32) {
    %c0_i32 = arith.constant 0 : i32
    %c0_i32_0 = arith.constant 0 : i32
    %c0_i32_1 = arith.constant 0 : i32
    return %arg0, %c0_i32, %c0_i32_0 : i32, i32, i32
  }
  func.func @transform_7(%arg0: i32) -> (i32, i32, i32) {
    %c0_i32 = arith.constant 0 : i32
    %c0_i32_0 = arith.constant 0 : i32
    %c0_i32_1 = arith.constant 0 : i32
    return %arg0, %c0_i32, %c0_i32_0 : i32, i32, i32
  }
}

</mosaic_0001>

<llo_original>
// kernel: tpu_custom_call.1
$region0: #{tpu_custom_call.1}
  #allocation0 [shape = 'u32[]', space=smem, size = 0x4, offset = 0x4, fixed_abs, tag = 'smem constant byte address 0x4 - core index']
  #allocation1 [shape = 'u32[144,128]{1,0:T(1,128)}', space=vmem, size = 0x12000, scoped, tag = 'internal scratch']
  %s0 = inlined_call_operand.hbm [shape: bf16[2,8,32], index: 0, kind: input, shape index: {}]
  %s1 = inlined_call_operand.hbm [shape: bf16[2,8,32], index: 1, kind: input, shape index: {}]
  %s2 = inlined_call_operand.hbm [shape: bf16[2,8,32], index: 2, kind: input, shape index: {}]
  %s3 = inlined_call_operand.hbm [shape: bf16[32,96], index: 3, kind: input, shape index: {}]
  %s4 = inlined_call_operand.vmem [shape: f32[1,96], index: 4, kind: input, shape index: {}]
  %s5 = inlined_call_operand.hbm [shape: bf16[2,8,32], index: 5, kind: output, shape index: {0}]
  %s6 = inlined_call_operand.hbm [shape: bf16[2,8,32], index: 6, kind: output, shape index: {1}]
  %s7 = inlined_call_operand.hbm [shape: bf16[2,8,32], index: 7, kind: output, shape index: {2}]
  %8 = xla_tuple %s5, %s6, %s7
  %s9 = sld [smem:[#allocation0]]
  $region85: #{tpu_custom_call.1} parent=0
    _
  %s11 = ssub.s32 1, %s9
  %s12 = scalar_select 0, %s11, %s9
  $region1: #{tpu_custom_call.1} parent=0
    #allocation2 [shape = 'u8[4096]{0}', space=vmem, size = 0x1000, scoped, tag = 'input window, operand 0']
    #allocation3 [shape = 's32[2]{0}', space=sflag, size = 0x8, scoped, tag = 'scoped memory for tpu_custom_call.1']
    #allocation4 [shape = 's32[2]{0}', space=sflag, size = 0x8, scoped, tag = 'scoped memory for tpu_custom_call.1']
    #allocation5 [shape = 'u8[4096]{0}', space=vmem, size = 0x1000, scoped, tag = 'input window, operand 1']
    #allocation6 [shape = 's32[2]{0}', space=sflag, size = 0x8, scoped, tag = 'scoped memory for tpu_custom_call.1']
    #allocation7 [shape = 'u8[4096]{0}', space=vmem, size = 0x1000, scoped, tag = 'input window, operand 2']
    #allocation8 [shape = 'u8[8192]{0}', space=vmem, size = 0x2000, scoped, tag = 'input window, operand 3, single buffered']
    #allocation9 [shape = 's32[1]{0}', space=sflag, size = 0x4, scoped, tag = 'scoped memory for tpu_custom_call.1']
    #allocation10 [shape = 'u8[4096]{0}', space=vmem, size = 0x1000, scoped, tag = 'output window, operand 0']
    #allocation11 [shape = 'u8[4096]{0}', space=vmem, size = 0x1000, scoped, tag = 'output window, operand 1']
    #allocation12 [shape = 's32[2]{0}', space=sflag, size = 0x8, scoped, tag = 'scoped memory for tpu_custom_call.1']
    #allocation13 [shape = 'u8[4096]{0}', space=vmem, size = 0x1000, scoped, tag = 'output window, operand 2']
    %13 = vsyncpa [#allocation3], 0
    %s14 = scalar_lea.sflag [#allocation3], 1
    %15 = vsyncpa %s14, 0
    %16 = vsyncpa [#allocation6], 0
    %s17 = scalar_lea.sflag [#allocation6], 1
    %18 = vsyncpa %s17, 0
    %19 = vsyncpa [#allocation9], 0
    %20 = vsyncpa [#allocation4], 0
    %s21 = scalar_lea.sflag [#allocation4], 1
    %22 = vsyncpa %s21, 0
    %23 = vsyncpa [#allocation12], 0
    %s24 = scalar_lea.sflag [#allocation12], 1
    %25 = vsyncpa %s24, 0
    loop: start=0, step=1, limit=4
    $region2: #{tpu_custom_call.1} parent=1 // loop_pre_header
      _
    $region3: #{tpu_custom_call.1} parent=1 // loop_header
      %s27 = sphi 0, %s31
      %p28 = scmp.ge.s32.totalorder %s27, 4
      %s37 = sphi 0, %s39
      %s40 = sphi 0, %s37
      %s41 = sphi 0, %s40
      %s57 = sphi 0, %s41
      %s63 = sphi 0, %s65
      %s66 = sphi 0, %s63
      %s67 = sphi 0, %s66
      %s83 = sphi 0, %s67
      %s89 = sphi 0, %s91
      %s92 = sphi 0, %s89
      %s93 = sphi 0, %s92
      %s109 = sphi 0, %s93
      %s113 = sphi 0, %s113
      %s115 = sphi 0, %s113
      %s116 = sphi 0, %s115
      %s130 = sphi 0, %s116
      %s134 = sphi 0, %s134
      %s136 = sphi 0, %s134
      %s137 = sphi 0, %s136
      %s151 = sphi 0, %s137
      %s157 = sphi 0, %s159
      %s160 = sphi 0, %s157
      %s161 = sphi 0, %s160
      %s177 = sphi 0, %s161
      %s183 = sphi 0, %s185
      %s186 = sphi 0, %s183
      %s187 = sphi 0, %s186
      %s203 = sphi 0, %s187
      %s209 = sphi 0, %s211
      %s212 = sphi 0, %s209
      %s213 = sphi 0, %s212
      %s229 = sphi 0, %s213
    $region4: #{tpu_custom_call.1} parent=1 // loop_header_branch
      %30 = sbr.rel (%p28) target = $region8
    $region5: #{tpu_custom_call.1} parent=1 // loop_body
      %s32 = ssub.s32 %s27, 1
      %s33 = ssub.s32 %s27, 2
      %s34 = sadd.s32 %s27, 1
      %s35 = ssub.s32 %s27, %s34
      %p36 = scmp.eq.s32.totalorder %s35, 0
      %s38 = sadd.s32 %s37, 1
      %s39 = scalar_select %p36, %s37, %s38
      %p42 = pneg %p36
      %p43 = scmp.eq.s32.totalorder %s27, 1
      %p44 = por %p42, %p43
      %p45 = scmp.ne.s32.totalorder %s37, %s40
      %p46 = scmp.eq.s32.totalorder %s27, 0
      %p47 = por %p45, %p46
      %p48 = scmp.ne.s32.totalorder %s37, %s40
      %p49 = scmp.eq.s32.totalorder %s32, 1
      %p50 = por %p48, %p49
      %p51 = scmp.ne.s32.totalorder %s40, %s41
      %p52 = scmp.eq.s32.totalorder %s32, 0
      %p53 = por %p51, %p52
      %p54 = scmp.ne.s32.totalorder %s40, %s41
      %p55 = scmp.eq.s32.totalorder %s33, 1
      %p56 = por %p54, %p55
      %p58 = scmp.ne.s32.totalorder %s41, %s57
      %p59 = scmp.eq.s32.totalorder %s33, 0
      %p60 = por %p58, %p59
      %s61 = ssub.s32 %s27, %s34
      %p62 = scmp.eq.s32.totalorder %s61, 0
      %s64 = sadd.s32 %s63, 1
      %s65 = scalar_select %p62, %s63, %s64
      %p68 = pneg %p62
      %p69 = scmp.eq.s32.totalorder %s27, 1
      %p70 = por %p68, %p69
      %p71 = scmp.ne.s32.totalorder %s63, %s66
      %p72 = scmp.eq.s32.totalorder %s27, 0
      %p73 = por %p71, %p72
      %p74 = scmp.ne.s32.totalorder %s63, %s66
      %p75 = scmp.eq.s32.totalorder %s32, 1
      %p76 = por %p74, %p75
      %p77 = scmp.ne.s32.totalorder %s66, %s67
      %p78 = scmp.eq.s32.totalorder %s32, 0
      %p79 = por %p77, %p78
      %p80 = scmp.ne.s32.totalorder %s66, %s67
      %p81 = scmp.eq.s32.totalorder %s33, 1
      %p82 = por %p80, %p81
      %p84 = scmp.ne.s32.totalorder %s67, %s83
      %p85 = scmp.eq.s32.totalorder %s33, 0
      %p86 = por %p84, %p85
      %s87 = ssub.s32 %s27, %s34
      %p88 = scmp.eq.s32.totalorder %s87, 0
      %s90 = sadd.s32 %s89, 1
      %s91 = scalar_select %p88, %s89, %s90
      %p94 = pneg %p88
      %p95 = scmp.eq.s32.totalorder %s27, 1
      %p96 = por %p94, %p95
      %p97 = scmp.ne.s32.totalorder %s89, %s92
      %p98 = scmp.eq.s32.totalorder %s27, 0
      %p99 = por %p97, %p98
      %p100 = scmp.ne.s32.totalorder %s89, %s92
      %p101 = scmp.eq.s32.totalorder %s32, 1
      %p102 = por %p100, %p101
      %p103 = scmp.ne.s32.totalorder %s92, %s93
      %p104 = scmp.eq.s32.totalorder %s32, 0
      %p105 = por %p103, %p104
      %p106 = scmp.ne.s32.totalorder %s92, %s93
      %p107 = scmp.eq.s32.totalorder %s33, 1
      %p108 = por %p106, %p107
      %p110 = scmp.ne.s32.totalorder %s93, %s109
      %p111 = scmp.eq.s32.totalorder %s33, 0
      %p112 = por %p110, %p111
      %s114 = sadd.s32 %s113, 1
      %p117 = scmp.eq.s32.totalorder %s27, 1
      %p118 = scmp.ne.s32.totalorder %s113, %s115
      %p119 = scmp.eq.s32.totalorder %s27, 0
      %p120 = por %p118, %p119
      %p121 = scmp.ne.s32.totalorder %s113, %s115
      %p122 = scmp.eq.s32.totalorder %s32, 1
      %p123 = por %p121, %p122
      %p124 = scmp.ne.s32.totalorder %s115, %s116
      %p125 = scmp.eq.s32.totalorder %s32, 0
      %p126 = por %p124, %p125
      %p127 = scmp.ne.s32.totalorder %s115, %s116
      %p128 = scmp.eq.s32.totalorder %s33, 1
      %p129 = por %p127, %p128
      %p131 = scmp.ne.s32.totalorder %s116, %s130
      %p132 = scmp.eq.s32.totalorder %s33, 0
      %p133 = por %p131, %p132
      %s135 = sadd.s32 %s134, 1
      %p138 = scmp.eq.s32.totalorder %s27, 1
      %p139 = scmp.ne.s32.totalorder %s134, %s136
      %p140 = scmp.eq.s32.totalorder %s27, 0
      %p141 = por %p139, %p140
      %p142 = scmp.ne.s32.totalorder %s134, %s136
      %p143 = scmp.eq.s32.totalorder %s32, 1
      %p144 = por %p142, %p143
      %p145 = scmp.ne.s32.totalorder %s136, %s137
      %p146 = scmp.eq.s32.totalorder %s32, 0
      %p147 = por %p145, %p146
      %p148 = scmp.ne.s32.totalorder %s136, %s137
      %p149 = scmp.eq.s32.totalorder %s33, 1
      %p150 = por %p148, %p149
      %p152 = scmp.ne.s32.totalorder %s137, %s151
      %p153 = scmp.eq.s32.totalorder %s33, 0
      %p154 = por %p152, %p153
      %s155 = ssub.s32 %s27, %s34
      %p156 = scmp.eq.s32.totalorder %s155, 0
      %s158 = sadd.s32 %s157, 1
      %s159 = scalar_select %p156, %s157, %s158
      %p162 = pneg %p156
      %p163 = scmp.eq.s32.totalorder %s27, 1
      %p164 = por %p162, %p163
      %p165 = scmp.ne.s32.totalorder %s157, %s160
      %p166 = scmp.eq.s32.totalorder %s27, 0
      %p167 = por %p165, %p166
      %p168 = scmp.ne.s32.totalorder %s157, %s160
      %p169 = scmp.eq.s32.totalorder %s32, 1
      %p170 = por %p168, %p169
      %p171 = scmp.ne.s32.totalorder %s160, %s161
      %p172 = scmp.eq.s32.totalorder %s32, 0
      %p173 = por %p171, %p172
      %p174 = scmp.ne.s32.totalorder %s160, %s161
      %p175 = scmp.eq.s32.totalorder %s33, 1
      %p176 = por %p174, %p175
      %p178 = scmp.ne.s32.totalorder %s161, %s177
      %p179 = scmp.eq.s32.totalorder %s33, 0
      %p180 = por %p178, %p179
      %s181 = ssub.s32 %s27, %s34
      %p182 = scmp.eq.s32.totalorder %s181, 0
      %s184 = sadd.s32 %s183, 1
      %s185 = scalar_select %p182, %s183, %s184
      %p188 = pneg %p182
      %p189 = scmp.eq.s32.totalorder %s27, 1
      %p190 = por %p188, %p189
      %p191 = scmp.ne.s32.totalorder %s183, %s186
      %p192 = scmp.eq.s32.totalorder %s27, 0
      %p193 = por %p191, %p192
      %p194 = scmp.ne.s32.totalorder %s183, %s186
      %p195 = scmp.eq.s32.totalorder %s32, 1
      %p196 = por %p194, %p195
      %p197 = scmp.ne.s32.totalorder %s186, %s187
      %p198 = scmp.eq.s32.totalorder %s32, 0
      %p199 = por %p197, %p198
      %p200 = scmp.ne.s32.totalorder %s186, %s187
      %p201 = scmp.eq.s32.totalorder %s33, 1
      %p202 = por %p200, %p201
      %p204 = scmp.ne.s32.totalorder %s187, %s203
      %p205 = scmp.eq.s32.totalorder %s33, 0
      %p206 = por %p204, %p205
      %s207 = ssub.s32 %s27, %s34
      %p208 = scmp.eq.s32.totalorder %s207, 0
      %s210 = sadd.s32 %s209, 1
      %s211 = scalar_select %p208, %s209, %s210
      %p214 = pneg %p208
      %p215 = scmp.eq.s32.totalorder %s27, 1
      %p216 = por %p214, %p215
      %p217 = scmp.ne.s32.totalorder %s209, %s212
      %p218 = scmp.eq.s32.totalorder %s27, 0
      %p219 = por %p217, %p218
      %p220 = scmp.ne.s32.totalorder %s209, %s212
      %p221 = scmp.eq.s32.totalorder %s32, 1
      %p222 = por %p220, %p221
      %p223 = scmp.ne.s32.totalorder %s212, %s213
      %p224 = scmp.eq.s32.totalorder %s32, 0
      %p225 = por %p223, %p224
      %p226 = scmp.ne.s32.totalorder %s212, %s213
      %p227 = scmp.eq.s32.totalorder %s33, 1
      %p228 = por %p226, %p227
      %p230 = scmp.ne.s32.totalorder %s213, %s229
      %p231 = scmp.eq.s32.totalorder %s33, 0
      %p232 = por %p230, %p231
      %p233 = scmp.le.s32.totalorder 1, %s27
      %p234 = scmp.lt.s32.totalorder %s27, 3
      %p235 = pnand %p233, %p234
      %p236 = pneg %p235
      // Predicated region
      $region9: #{tpu_custom_call.1} parent=5 // pred_check
        _
      $region10: #{tpu_custom_call.1} parent=5 // pred_check_branch
        %238 = sbr.rel (%p235) target = $region12
      $region11: #{tpu_custom_call.1} parent=5 // pred_region
        %s239 = ssub.s32 %s27, 1
        // Predicated region
        $region13: #{tpu_custom_call.1} parent=11 // pred_check
          %p240 = pneg %p126
        $region14: #{tpu_custom_call.1} parent=11 // pred_check_branch
          %242 = sbr.rel (%p240) target = $region16
        $region15: #{tpu_custom_call.1} parent=11 // pred_region
          %s244 = ssub.s32 256, 256
          %245 = vsyncadd [#allocation9], %s244
          %s246 = sshll.u32 [#allocation8], 4
          %s247 = int_to_ptr.vmem [resolvable:$true] %s246
          %252 = dma.hbm_to_vmem [thread:$0]  %s3, 256, %s247, [#allocation9], 64, 64, 4
        $region16: #{tpu_custom_call.1} parent=11 // pred_fallthru
          _
        // Predicated region
        $region17: #{tpu_custom_call.1} parent=11 // pred_check
          %p253 = pneg %p147
        $region18: #{tpu_custom_call.1} parent=11 // pred_check_branch
          %255 = sbr.rel (%p253) target = $region20
        $region19: #{tpu_custom_call.1} parent=11 // pred_region
          _
        $region20: #{tpu_custom_call.1} parent=11 // pred_fallthru
          _
      $region12: #{tpu_custom_call.1} parent=5 // pred_fallthru
        _
      %p256 = scmp.lt.s32.totalorder %s27, 2
      // Predicated region
      $region21: #{tpu_custom_call.1} parent=5 // pred_check
        %p257 = pneg %p256
      $region22: #{tpu_custom_call.1} parent=5 // pred_check_branch
        %259 = sbr.rel (%p257) target = $region24
      $region23: #{tpu_custom_call.1} parent=5 // pred_region
        // Predicated region
        $region25: #{tpu_custom_call.1} parent=23 // pred_check
          %p260 = pneg %p47
        $region26: #{tpu_custom_call.1} parent=23 // pred_check_branch
          %262 = sbr.rel (%p260) target = $region28
        $region27: #{tpu_custom_call.1} parent=23 // pred_region
          %s263 = sand.u32 %s37, 1
          %s264 = scalar_lea.sflag [#allocation3], %s263
          %s265 = sand.u32 %s37, 1
          %s266 = smul.addr %s265, 4
          %s267 = scalar_lea.vmem [#allocation2], %s266
          %s269 = ssub.s32 64, 64
          %270 = vsyncadd %s264, %s269
          %s271 = smul.addr %s27, 64
          %s272 = scalar_lea.hbm %s0, %s271
          %s274 = sshll.u32 %s267, 4
          %s275 = int_to_ptr.vmem [resolvable:$true] %s274
          %277 = dma.hbm_to_vmem [thread:$0]  %s272, 64, %s275, %s264
        $region28: #{tpu_custom_call.1} parent=23 // pred_fallthru
          _
        // Predicated region
        $region29: #{tpu_custom_call.1} parent=23 // pred_check
          %p278 = pneg %p73
        $region30: #{tpu_custom_call.1} parent=23 // pred_check_branch
          %280 = sbr.rel (%p278) target = $region32
        $region31: #{tpu_custom_call.1} parent=23 // pred_region
          %s281 = sand.u32 %s27, 1
          %s282 = scalar_lea.sflag [#allocation6], %s281
          %s283 = sand.u32 %s63, 1
          %s284 = smul.addr %s283, 4
          %s285 = scalar_lea.vmem [#allocation5], %s284
          %s287 = ssub.s32 64, 64
          %288 = vsyncadd %s282, %s287
          %s289 = smul.addr %s27, 64
          %s290 = scalar_lea.hbm %s1, %s289
          %s292 = sshll.u32 %s285, 4
          %s293 = int_to_ptr.vmem [resolvable:$true] %s292
          %295 = dma.hbm_to_vmem [thread:$0]  %s290, 64, %s293, %s282
        $region32: #{tpu_custom_call.1} parent=23 // pred_fallthru
          _
        // Predicated region
        $region33: #{tpu_custom_call.1} parent=23 // pred_check
          %p296 = pneg %p99
        $region34: #{tpu_custom_call.1} parent=23 // pred_check_branch
          %298 = sbr.rel (%p296) target = $region36
        $region35: #{tpu_custom_call.1} parent=23 // pred_region
          %s299 = sand.u32 %s27, 1
          %s300 = scalar_lea.sflag [#allocation6], %s299
          %s301 = sand.u32 %s89, 1
          %s302 = smul.addr %s301, 4
          %s303 = scalar_lea.vmem [#allocation7], %s302
          %s305 = ssub.s32 64, 64
          %306 = vsyncadd %s300, %s305
          %s307 = smul.addr %s27, 64
          %s308 = scalar_lea.hbm %s2, %s307
          %s310 = sshll.u32 %s303, 4
          %s311 = int_to_ptr.vmem [resolvable:$true] %s310
          %313 = dma.hbm_to_vmem [thread:$0]  %s308, 64, %s311, %s300
        $region36: #{tpu_custom_call.1} parent=23 // pred_fallthru
          _
      $region24: #{tpu_custom_call.1} parent=5 // pred_fallthru
        _
      %p314 = scmp.le.s32.totalorder 1, %s27
      %p315 = scmp.lt.s32.totalorder %s27, 3
      %p316 = pnand %p314, %p315
      %p317 = pneg %p316
      // Predicated region
      $region37: #{tpu_custom_call.1} parent=5 // pred_check
        _
      $region38: #{tpu_custom_call.1} parent=5 // pred_check_branch
        %319 = sbr.rel (%p316) target = $region40
      $region39: #{tpu_custom_call.1} parent=5 // pred_region
        %s320 = ssub.s32 %s27, 1
        %s321 = sand.u32 %s40, 1
        %s322 = scalar_lea.sflag [#allocation3], %s321
        %s323 = sand.u32 %s40, 1
        %s324 = smul.addr %s323, 4
        %s325 = scalar_lea.vmem [#allocation2], %s324
        // Predicated region
        $region41: #{tpu_custom_call.1} parent=39 // pred_check
          %p326 = pneg %p53
        $region42: #{tpu_custom_call.1} parent=39 // pred_check_branch
          %328 = sbr.rel (%p326) target = $region44
        $region43: #{tpu_custom_call.1} parent=39 // pred_region
          %329 = dma.done %s322, 64
        $region44: #{tpu_custom_call.1} parent=39 // pred_fallthru
          _
        %s330 = sand.u32 %s32, 1
        %s331 = scalar_lea.sflag [#allocation6], %s330
        %s332 = sand.u32 %s66, 1
        %s333 = smul.addr %s332, 4
        %s334 = scalar_lea.vmem [#allocation5], %s333
        // Predicated region
        $region45: #{tpu_custom_call.1} parent=39 // pred_check
          %p335 = pneg %p79
        $region46: #{tpu_custom_call.1} parent=39 // pred_check_branch
          %337 = sbr.rel (%p335) target = $region48
        $region47: #{tpu_custom_call.1} parent=39 // pred_region
          %338 = dma.done %s331, 64
        $region48: #{tpu_custom_call.1} parent=39 // pred_fallthru
          _
        %s339 = sand.u32 %s32, 1
        %s340 = scalar_lea.sflag [#allocation6], %s339
        %s341 = sand.u32 %s92, 1
        %s342 = smul.addr %s341, 4
        %s343 = scalar_lea.vmem [#allocation7], %s342
        // Predicated region
        $region49: #{tpu_custom_call.1} parent=39 // pred_check
          %p344 = pneg %p105
        $region50: #{tpu_custom_call.1} parent=39 // pred_check_branch
          %346 = sbr.rel (%p344) target = $region52
        $region51: #{tpu_custom_call.1} parent=39 // pred_region
          %347 = dma.done %s340, 64
        $region52: #{tpu_custom_call.1} parent=39 // pred_fallthru
          _
        // Predicated region
        $region53: #{tpu_custom_call.1} parent=39 // pred_check
          %p348 = pneg %p126
        $region54: #{tpu_custom_call.1} parent=39 // pred_check_branch
          %350 = sbr.rel (%p348) target = $region56
        $region55: #{tpu_custom_call.1} parent=39 // pred_region
          %351 = dma.done [#allocation9], 256
        $region56: #{tpu_custom_call.1} parent=39 // pred_fallthru
          _
        %s352 = sand.u32 %s40, 1
        %s353 = scalar_lea.sflag [#allocation3], %s352
        %s354 = sand.u32 %s40, 1
        %s355 = smul.addr %s354, 4
        %s356 = scalar_lea.vmem [#allocation2], %s355
        %p357 = pneg %p53
        %p358 = pneg %p50
        %s359 = sand.u32 %s32, 1
        %s360 = scalar_lea.sflag [#allocation6], %s359
        %s361 = sand.u32 %s66, 1
        %s362 = smul.addr %s361, 4
        %s363 = scalar_lea.vmem [#allocation5], %s362
        %p364 = pneg %p79
        %p365 = pneg %p76
        %s366 = sand.u32 %s32, 1
        %s367 = scalar_lea.sflag [#allocation6], %s366
        %s368 = sand.u32 %s92, 1
        %s369 = smul.addr %s368, 4
        %s370 = scalar_lea.vmem [#allocation7], %s369
        %p371 = pneg %p105
        %p372 = pneg %p102
        %p373 = pneg %p126
        %p374 = pneg %p123
        %p375 = pneg %p147
        %p376 = pneg %p144
        %p377 = pneg %p173
        %p378 = pneg %p170
        %s379 = sand.u32 %s160, 1
        %s380 = scalar_lea.sflag [#allocation4], %s379
        %s381 = sand.u32 %s160, 1
        %s382 = smul.addr %s381, 4
        %s383 = scalar_lea.vmem [#allocation10], %s382
        %p384 = pneg %p199
        %p385 = pneg %p196
        %s386 = sand.u32 %s32, 1
        %s387 = scalar_lea.sflag [#allocation12], %s386
        %s388 = sand.u32 %s186, 1
        %s389 = smul.addr %s388, 4
        %s390 = scalar_lea.vmem [#allocation11], %s389
        %p391 = pneg %p225
        %p392 = pneg %p222
        %s393 = sand.u32 %s32, 1
        %s394 = scalar_lea.sflag [#allocation12], %s393
        %s395 = sand.u32 %s212, 1
        %s396 = smul.addr %s395, 4
        %s397 = scalar_lea.vmem [#allocation13], %s396
        %v399 = vld [vmem:[#allocation8] sm:$0xf]
        %v400 = vld [vmem:[#allocation8 + $0x4] sm:$0xf]
        %v401 = vld [vmem:[#allocation8 + $0x8] sm:$0xf]
        %v402 = vld [vmem:[#allocation8 + $0xc] sm:$0xf]
        %v403 = vld [vmem:[%s4] sm:$0x1]
        %v404 = vld [vmem:[%s325] sm:$0xf]
        %v406 = vlaneseq
        %v407 = vshrl.u32 %v406, 7
        %v408 = vsub.s32 0, %v407
        %v409 = vrot.slane %v403, %v408
        %v415 = vunpack.c.l.b16 %v399
        %v416 = vunpack.c.l.b16 %v400
        %v417 = vunpack.c.l.b16 %v401
        %v418 = vunpack.c.l.b16 %v402
        %v419 = vpack.c.b16 %v416, %v415
        %v420 = vpack.c.b16 %v418, %v417
        %vm423 = vcmask 261120
        %v425 = vsel %vm423, %v404, 0
        %427 = vmatprep.subr.bf16.mxu0 0
        %428 = vmatpush1.bf16.msra.mxu0 %v419
        %429 = vmatprep.subr.bf16.mxu0 0
        %430 = vmatpush1.bf16.msra.mxu0 %v420
        %431 = vmatprep.subr.bf16.mxu0 0
        %432 = vmatpush1.bf16.msra.mxu0 0
        %433 = vmatprep.subr.bf16.mxu0 0
        %434 = vmatpush1.bf16.msra.mxu0 0
        %435 = vmatprep.subr.bf16.mxu0 0
        %436 = vmatpush1.bf16.msra.mxu0 0
        %437 = vmatprep.subr.bf16.mxu0 0
        %438 = vmatpush1.bf16.msra.mxu0 0
        %439 = vmatprep.subr.bf16.mxu0 0
        %440 = vmatpush1.bf16.msra.mxu0 0
        %441 = vmatprep.subr.bf16.mxu0 0
        %442 = vmatpush1.bf16.msra.mxu0 0
        %443 = vmatprep.subr.bf16.mxu0 0
        %444 = vmatpush1.bf16.msra.mxu0 0
        %445 = vmatprep.subr.bf16.mxu0 0
        %446 = vmatpush1.bf16.msra.mxu0 0
        %447 = vmatprep.subr.bf16.mxu0 0
        %448 = vmatpush1.bf16.msra.mxu0 0
        %449 = vmatprep.subr.bf16.mxu0 0
        %450 = vmatpush1.bf16.msra.mxu0 0
        %451 = vmatprep.subr.bf16.mxu0 0
        %452 = vmatpush1.bf16.msra.mxu0 0
        %453 = vmatprep.subr.bf16.mxu0 0
        %454 = vmatpush1.bf16.msra.mxu0 0
        %455 = vmatprep.subr.bf16.mxu0 0
        %456 = vmatpush1.bf16.msra.mxu0 0
        %457 = vmatprep.subr.bf16.mxu0 0
        %458 = vmatpush1.bf16.msra.mxu0 0
        %459 = vmatprep.mubr.bf16.mxu0 0
        %460 = vmatmul.mubr.bf16.gmra.mrb[0].mxu0 %v425
        %v461 = vpop.f32.mrb[0].mxu0
        %v462 = vadd.f32 %v409, %v461
        %v463 = vpop.f32.mrb[0].mxu0
        %v464 = vpop.f32.mrb[0].mxu0
        %v465 = vpop.f32.mrb[0].mxu0
        %466 = vdwg.mxu0
        %v467 = vpack.c.bf16 %v462, %v462
        %vm468 = vcmask 257024
        %469 = vst.msk [vmem:[%s383] sm:$0xf] %vm468, %v467
        %v470 = vld [vmem:[%s334] sm:$0xf]
        %471 = vrot.lane.b32.xlu0 %v419, 96
        %v472 = vpop.permute.xlu0 %471
        %473 = vrot.lane.b32.xlu0 %v420, 96
        %v474 = vpop.permute.xlu0 %473
        %477 = vrot.lane.b32.xlu0 %v409, 96
        %v478 = vpop.permute.xlu0 %477
        %v481 = vsel %vm423, %v470, 0
        %483 = vmatprep.subr.bf16.mxu0 0
        %484 = vmatpush1.bf16.msra.mxu0 %v472
        %485 = vmatprep.subr.bf16.mxu0 0
        %486 = vmatpush1.bf16.msra.mxu0 %v474
        %487 = vmatprep.subr.bf16.mxu0 0
        %488 = vmatpush1.bf16.msra.mxu0 0
        %489 = vmatprep.subr.bf16.mxu0 0
        %490 = vmatpush1.bf16.msra.mxu0 0
        %491 = vmatprep.subr.bf16.mxu0 0
        %492 = vmatpush1.bf16.msra.mxu0 0
        %493 = vmatprep.subr.bf16.mxu0 0
        %494 = vmatpush1.bf16.msra.mxu0 0
        %495 = vmatprep.subr.bf16.mxu0 0
        %496 = vmatpush1.bf16.msra.mxu0 0
        %497 = vmatprep.subr.bf16.mxu0 0
        %498 = vmatpush1.bf16.msra.mxu0 0
        %499 = vmatprep.subr.bf16.mxu0 0
        %500 = vmatpush1.bf16.msra.mxu0 0
        %501 = vmatprep.subr.bf16.mxu0 0
        %502 = vmatpush1.bf16.msra.mxu0 0
        %503 = vmatprep.subr.bf16.mxu0 0
        %504 = vmatpush1.bf16.msra.mxu0 0
        %505 = vmatprep.subr.bf16.mxu0 0
        %506 = vmatpush1.bf16.msra.mxu0 0
        %507 = vmatprep.subr.bf16.mxu0 0
        %508 = vmatpush1.bf16.msra.mxu0 0
        %509 = vmatprep.subr.bf16.mxu0 0
        %510 = vmatpush1.bf16.msra.mxu0 0
        %511 = vmatprep.subr.bf16.mxu0 0
        %512 = vmatpush1.bf16.msra.mxu0 0
        %513 = vmatprep.subr.bf16.mxu0 0
        %514 = vmatpush1.bf16.msra.mxu0 0
        %515 = vmatprep.mubr.bf16.mxu0 0
        %516 = vmatmul.mubr.bf16.gmra.mrb[0].mxu0 %v481
        %v517 = vpop.f32.mrb[0].mxu0
        %v518 = vadd.f32 %v478, %v517
        %v519 = vpop.f32.mrb[0].mxu0
        %v520 = vpop.f32.mrb[0].mxu0
        %v521 = vpop.f32.mrb[0].mxu0
        %522 = vdwg.mxu0
        %v523 = vpack.c.bf16 %v518, %v518
        %524 = vst.msk [vmem:[%s390] sm:$0xf] %vm468, %v523
        %v525 = vld [vmem:[%s343] sm:$0xf]
        %526 = vrot.lane.b32.xlu0 %v419, 64
        %v527 = vpop.permute.xlu0 %526
        %528 = vrot.lane.b32.xlu0 %v420, 64
        %v529 = vpop.permute.xlu0 %528
        %532 = vrot.lane.b32.xlu0 %v409, 64
        %v533 = vpop.permute.xlu0 %532
        %v536 = vsel %vm423, %v525, 0
        %538 = vmatprep.subr.bf16.mxu0 0
        %539 = vmatpush1.bf16.msra.mxu0 %v527
        %540 = vmatprep.subr.bf16.mxu0 0
        %541 = vmatpush1.bf16.msra.mxu0 %v529
        %542 = vmatprep.subr.bf16.mxu0 0
        %543 = vmatpush1.bf16.msra.mxu0 0
        %544 = vmatprep.subr.bf16.mxu0 0
        %545 = vmatpush1.bf16.msra.mxu0 0
        %546 = vmatprep.subr.bf16.mxu0 0
        %547 = vmatpush1.bf16.msra.mxu0 0
        %548 = vmatprep.subr.bf16.mxu0 0
        %549 = vmatpush1.bf16.msra.mxu0 0
        %550 = vmatprep.subr.bf16.mxu0 0
        %551 = vmatpush1.bf16.msra.mxu0 0
        %552 = vmatprep.subr.bf16.mxu0 0
        %553 = vmatpush1.bf16.msra.mxu0 0
        %554 = vmatprep.subr.bf16.mxu0 0
        %555 = vmatpush1.bf16.msra.mxu0 0
        %556 = vmatprep.subr.bf16.mxu0 0
        %557 = vmatpush1.bf16.msra.mxu0 0
        %558 = vmatprep.subr.bf16.mxu0 0
        %559 = vmatpush1.bf16.msra.mxu0 0
        %560 = vmatprep.subr.bf16.mxu0 0
        %561 = vmatpush1.bf16.msra.mxu0 0
        %562 = vmatprep.subr.bf16.mxu0 0
        %563 = vmatpush1.bf16.msra.mxu0 0
        %564 = vmatprep.subr.bf16.mxu0 0
        %565 = vmatpush1.bf16.msra.mxu0 0
        %566 = vmatprep.subr.bf16.mxu0 0
        %567 = vmatpush1.bf16.msra.mxu0 0
        %568 = vmatprep.subr.bf16.mxu0 0
        %569 = vmatpush1.bf16.msra.mxu0 0
        %570 = vmatprep.mubr.bf16.mxu0 0
        %571 = vmatmul.mubr.bf16.gmra.mrb[0].mxu0 %v536
        %v572 = vpop.f32.mrb[0].mxu0
        %v573 = vadd.f32 %v533, %v572
        %v574 = vpop.f32.mrb[0].mxu0
        %v575 = vpop.f32.mrb[0].mxu0
        %v576 = vpop.f32.mrb[0].mxu0
        %577 = vdwg.mxu0
        %v578 = vpack.c.bf16 %v573, %v573
        %579 = vst.msk [vmem:[%s397] sm:$0xf] %vm468, %v578
        %s580 = sand.u32 %s160, 1
        %s581 = scalar_lea.sflag [#allocation4], %s580
        %s582 = sand.u32 %s160, 1
        %s583 = smul.addr %s582, 4
        %s584 = scalar_lea.vmem [#allocation10], %s583
        %s585 = sand.u32 %s32, 1
        %s586 = scalar_lea.sflag [#allocation12], %s585
        %s587 = sand.u32 %s186, 1
        %s588 = smul.addr %s587, 4
        %s589 = scalar_lea.vmem [#allocation11], %s588
        %s590 = sand.u32 %s32, 1
        %s591 = scalar_lea.sflag [#allocation12], %s590
        %s592 = sand.u32 %s212, 1
        %s593 = smul.addr %s592, 4
        %s594 = scalar_lea.vmem [#allocation13], %s593
        // Predicated region
        $region57: #{tpu_custom_call.1} parent=39 // pred_check
          %p595 = pneg %p170
        $region58: #{tpu_custom_call.1} parent=39 // pred_check_branch
          %597 = sbr.rel (%p595) target = $region60
        $region59: #{tpu_custom_call.1} parent=39 // pred_region
          %s599 = ssub.s32 64, 64
          %600 = vsyncadd %s581, %s599
          %s601 = smul.addr %s32, 64
          %s602 = scalar_lea.hbm %s5, %s601
          %s604 = sshll.u32 %s584, 4
          %s605 = int_to_ptr.vmem [resolvable:$true] %s604
          %607 = dma.vmem_to_hbm [thread:$0]  %s605, 64, %s602, %s581
        $region60: #{tpu_custom_call.1} parent=39 // pred_fallthru
          _
        // Predicated region
        $region61: #{tpu_custom_call.1} parent=39 // pred_check
          %p608 = pneg %p196
        $region62: #{tpu_custom_call.1} parent=39 // pred_check_branch
          %610 = sbr.rel (%p608) target = $region64
        $region63: #{tpu_custom_call.1} parent=39 // pred_region
          %s612 = ssub.s32 64, 64
          %613 = vsyncadd %s586, %s612
          %s614 = smul.addr %s32, 64
          %s615 = scalar_lea.hbm %s6, %s614
          %s617 = sshll.u32 %s589, 4
          %s618 = int_to_ptr.vmem [resolvable:$true] %s617
          %620 = dma.vmem_to_hbm [thread:$0]  %s618, 64, %s615, %s586
        $region64: #{tpu_custom_call.1} parent=39 // pred_fallthru
          _
        // Predicated region
        $region65: #{tpu_custom_call.1} parent=39 // pred_check
          %p621 = pneg %p222
        $region66: #{tpu_custom_call.1} parent=39 // pred_check_branch
          %623 = sbr.rel (%p621) target = $region68
        $region67: #{tpu_custom_call.1} parent=39 // pred_region
          %s625 = ssub.s32 64, 64
          %626 = vsyncadd %s591, %s625
          %s627 = smul.addr %s32, 64
          %s628 = scalar_lea.hbm %s7, %s627
          %s630 = sshll.u32 %s594, 4
          %s631 = int_to_ptr.vmem [resolvable:$true] %s630
          %633 = dma.vmem_to_hbm [thread:$0]  %s631, 64, %s628, %s591
        $region68: #{tpu_custom_call.1} parent=39 // pred_fallthru
          _
      $region40: #{tpu_custom_call.1} parent=5 // pred_fallthru
        _
      %p634 = scmp.le.s32.totalorder 2, %s27
      // Predicated region
      $region69: #{tpu_custom_call.1} parent=5 // pred_check
        %p635 = pneg %p634
      $region70: #{tpu_custom_call.1} parent=5 // pred_check_branch
        %637 = sbr.rel (%p635) target = $region72
      $region71: #{tpu_custom_call.1} parent=5 // pred_region
        %s638 = ssub.s32 %s27, 2
        // Predicated region
        $region73: #{tpu_custom_call.1} parent=71 // pred_check
          %p639 = pneg %p176
        $region74: #{tpu_custom_call.1} parent=71 // pred_check_branch
          %641 = sbr.rel (%p639) target = $region76
        $region75: #{tpu_custom_call.1} parent=71 // pred_region
          %s642 = sand.u32 %s161, 1
          %s643 = scalar_lea.sflag [#allocation4], %s642
          %s644 = sand.u32 %s161, 1
          %s645 = smul.addr %s644, 4
          %s646 = scalar_lea.vmem [#allocation10], %s645
          %647 = dma.done %s643, 64
        $region76: #{tpu_custom_call.1} parent=71 // pred_fallthru
          _
        // Predicated region
        $region77: #{tpu_custom_call.1} parent=71 // pred_check
          %p648 = pneg %p202
        $region78: #{tpu_custom_call.1} parent=71 // pred_check_branch
          %650 = sbr.rel (%p648) target = $region80
        $region79: #{tpu_custom_call.1} parent=71 // pred_region
          %s651 = sand.u32 %s33, 1
          %s652 = scalar_lea.sflag [#allocation12], %s651
          %s653 = sand.u32 %s187, 1
          %s654 = smul.addr %s653, 4
          %s655 = scalar_lea.vmem [#allocation11], %s654
          %656 = dma.done %s652, 64
        $region80: #{tpu_custom_call.1} parent=71 // pred_fallthru
          _
        // Predicated region
        $region81: #{tpu_custom_call.1} parent=71 // pred_check
          %p657 = pneg %p228
        $region82: #{tpu_custom_call.1} parent=71 // pred_check_branch
          %659 = sbr.rel (%p657) target = $region84
        $region83: #{tpu_custom_call.1} parent=71 // pred_region
          %s660 = sand.u32 %s33, 1
          %s661 = scalar_lea.sflag [#allocation12], %s660
          %s662 = sand.u32 %s213, 1
          %s663 = smul.addr %s662, 4
          %s664 = scalar_lea.vmem [#allocation13], %s663
          %665 = dma.done %s661, 64
        $region84: #{tpu_custom_call.1} parent=71 // pred_fallthru
          _
      $region72: #{tpu_custom_call.1} parent=5 // pred_fallthru
        _
    $region6: #{tpu_custom_call.1} parent=1 // loop_footer
      %s31 = sadd.s32 1, %s27
    $region7: #{tpu_custom_call.1} parent=1 // loop_footer_branch
      %26 = sbr.rel target = $region3
    $region8: #{tpu_custom_call.1} parent=1 // loop_exit
      _
    %666 = vsyncpa [#allocation3], 1
    %s667 = scalar_lea.sflag [#allocation3], 1
    %668 = vsyncpa %s667, 1
    %669 = vsyncpa [#allocation6], 1
    %s670 = scalar_lea.sflag [#allocation6], 1
    %671 = vsyncpa %s670, 1
    %672 = vsyncpa [#allocation9], 1
    %673 = vsyncpa [#allocation4], 1
    %s674 = scalar_lea.sflag [#allocation4], 1
    %675 = vsyncpa %s674, 1
    %676 = vsyncpa [#allocation12], 1
    %s677 = scalar_lea.sflag [#allocation12], 1
    %678 = vsyncpa %s677, 1

</llo_original>
